<compile_context>
chip_gen: v7x
topology: tpu7x:2x2x1
jax: 0.10.0
libtpu: 0.0.40
codegen_flags: <defaults>
</compile_context>

<pallas_src>
import functools

import jax
import jax.numpy as jnp
from jax import lax
from jax.experimental import pallas as pl
from jax.experimental.pallas import tpu as pltpu


def _bce_with_logits_kernel(pred_ref, targ_ref, out_ref, acc_ref, *,
                            total_elems, inv_total):
    c = pl.program_id(0)            # partial-sum index ("parallel" axis)
    i = pl.program_id(1)            # reduction tile index ("arbitrary" axis)
    n_i = pl.num_programs(1)

    @pl.when(i == 0)
    def _init():
        acc_ref[...] = jnp.zeros_like(acc_ref)

    # Upcast in-register; keep HBM traffic at the input dtype width.
    x = pred_ref[...].astype(jnp.float32)
    t = targ_ref[...].astype(jnp.float32)

    # Numerically stable BCE-with-logits: max(x,0) - x*t + log1p(exp(-|x|))
    loss = jnp.maximum(x, 0.0) - x * t + jnp.log1p(jnp.exp(-jnp.abs(x)))

    # Mask out the zero-padded tail (padding would otherwise contribute log(2) each).
    rows, lane = x.shape
    tile_idx = c * n_i + i
    row = lax.broadcasted_iota(jnp.int32, (rows, lane), 0)
    col = lax.broadcasted_iota(jnp.int32, (rows, lane), 1)
    flat = (tile_idx * rows + row) * lane + col
    loss = jnp.where(flat < total_elems, loss, 0.0)

    # Elementwise accumulate (VPU only); no per-tile reduce, no per-tile scalar store.
    acc_ref[...] += loss

    @pl.when(i == n_i - 1)
    def _finalize():
        # One cross-lane/sublane reduce per partial, scaled by 1/total (mean).
        partial = jnp.sum(acc_ref[...]) * inv_total
        out_ref[...] = jnp.broadcast_to(partial, out_ref.shape)


def bce_with_logits_mean(prediction, target, *, lane=1024, max_rows=512,
                         num_partials=2):
    """mean(BCEWithLogits(prediction, target)) as a scalar f32, via one Pallas kernel.

    Handles arbitrary input shapes by flattening, zero-padding to a whole number of
    lane-dense tiles and masking the tail inside the kernel.
    """
    assert prediction.shape == target.shape
    total = int(prediction.size)
    assert 0 < total < 2**31  # int32 flat-index masking inside the kernel

    # Tile rows: multiple of 8, capped at max_rows, shrunk for small inputs so we
    # do not pad a toy problem up to a huge tile.
    rows_if_one_tile = int(pl.cdiv(total, lane * num_partials))
    rows = min(max_rows, max(1, rows_if_one_tile))
    rows = ((rows + 7) // 8) * 8
    tiles_per_part = int(pl.cdiv(total, num_partials * rows * lane))
    padded = num_partials * tiles_per_part * rows * lane

    pred = jnp.pad(prediction.reshape(-1), (0, padded - total)).reshape(-1, lane)
    targ = jnp.pad(target.reshape(-1), (0, padded - total)).reshape(-1, lane)

    kernel = functools.partial(
        _bce_with_logits_kernel,
        total_elems=total,
        inv_total=1.0 / total,
    )

    in_map = lambda c, i: (c * tiles_per_part + i, 0)

    out = pl.pallas_call(
        kernel,
        grid=(num_partials, tiles_per_part),
        in_specs=[
            pl.BlockSpec((rows, lane), in_map),
            pl.BlockSpec((rows, lane), in_map),
        ],
        # One (8,128) output block per partial; written once on the last reduction step.
        out_specs=pl.BlockSpec((8, 128), lambda c, i: (c, 0)),
        out_shape=jax.ShapeDtypeStruct((num_partials * 8, 128), jnp.float32),
        scratch_shapes=[pltpu.VMEM((rows, lane), jnp.float32)],
        compiler_params=pltpu.CompilerParams(
            dimension_semantics=("parallel", "arbitrary"),
            vmem_limit_bytes=32 * 1024 * 1024,
        ),
    )(pred, targ)

    partials = out.reshape(num_partials, 8, 128)[:, 0, 0]
    return jnp.sum(partials)


# The PyTorch module is named TripletMarginLoss but its forward is literally
# BCEWithLogitsLoss(prediction, target); keep both names for clarity.
triplet_margin_loss = bce_with_logits_mean


def _reference(prediction, target):
    x = prediction.astype(jnp.float32)
    t = target.astype(jnp.float32)
    loss = jnp.maximum(x, 0.0) - x * t + jnp.log1p(jnp.exp(-jnp.abs(x)))
    return jnp.mean(loss)


if __name__ == "__main__":
    key = jax.random.PRNGKey(0)
    k1, k2, k3, k4, k5, k6 = jax.random.split(key, 6)

    # Test 1: small NCHW-ish logits tensor, default tiling (masked-tail path).
    pred1 = jax.random.normal(k1, (2, 4, 16, 16), dtype=jnp.float32) * 2.0
    targ1 = jax.random.uniform(k2, (2, 4, 16, 16), dtype=jnp.float32)
    out1 = jax.block_until_ready(triplet_margin_loss(pred1, targ1))
    ref1 = _reference(pred1, targ1)
    assert jnp.allclose(out1, ref1, atol=1e-5, rtol=1e-5), (out1, ref1)

    # Test 2: exact-fit shape with tiny tiles to exercise multi-tile accumulation
    # across the reduction axis and both partial-sum blocks (grid = (2, 4)).
    pred2 = jax.random.normal(k3, (16, 512), dtype=jnp.float32) * 2.0
    targ2 = jax.random.bernoulli(k4, 0.5, (16, 512)).astype(jnp.float32)
    out2 = jax.block_until_ready(
        bce_with_logits_mean(pred2, targ2, lane=128, max_rows=8))
    ref2 = _reference(pred2, targ2)
    assert jnp.allclose(out2, ref2, atol=1e-5, rtol=1e-5), (out2, ref2)

    # Test 3: odd/ragged shape with bf16 inputs (bf16 kept in HBM/VMEM, upcast in-kernel).
    pred3 = (jax.random.normal(k5, (5, 37), dtype=jnp.float32) * 2.0).astype(jnp.bfloat16)
    targ3 = jax.random.bernoulli(k6, 0.5, (5, 37)).astype(jnp.bfloat16)
    out3 = jax.block_until_ready(triplet_margin_loss(pred3, targ3))
    ref3 = _reference(pred3, targ3)
    assert jnp.allclose(out3, ref3, atol=1e-5, rtol=1e-5), (out3, ref3)

    print("KERNEL_OK")
</pallas_src>

<mosaic_0001>
module attributes {stable_mosaic.version = 11 : i64} {
  func.func @_bce_with_logits_kernel(%arg0: i32, %arg1: i32, %arg2: memref<8x1024xf32, #tpu.memory_space<vmem>>, %arg3: memref<8x1024xf32, #tpu.memory_space<vmem>>, %arg4: memref<8x128xf32, #tpu.memory_space<vmem>>, %arg5: memref<8x1024xf32, #tpu.memory_space<vmem>>) attributes {dimension_semantics = [#tpu.dimension_semantics<parallel>, #tpu.dimension_semantics<arbitrary>], iteration_bounds = array<i64: 2, 1>, scalar_prefetch = 0 : i64, scratch_operands = 1 : i64, tpu.core_type = #tpu.core_type<tc>, window_params = [{transform_indices = @transform_0, window_bounds = array<i64: 8, 1024>}, {transform_indices = @transform_1, window_bounds = array<i64: 8, 1024>}, {transform_indices = @transform_2, window_bounds = array<i64: 8, 128>}]} {
    %c0_i32 = arith.constant 0 : i32
    %0 = arith.cmpi eq, %arg1, %c0_i32 : i32
    %1 = arith.extui %0 : i1 to i32
    %c0_i32_0 = arith.constant 0 : i32
    %2 = arith.cmpi ne, %1, %c0_i32_0 : i32
    scf.if %2 {
      %cst_12 = arith.constant 0.000000e+00 : f32
      %35 = vector.broadcast %cst_12 : f32 to vector<8x1024xf32>
      %c0_13 = arith.constant 0 : index
      %c0_14 = arith.constant 0 : index
      %36 = vector.load %arg5[%c0_13, %c0_14] : memref<8x1024xf32, #tpu.memory_space<vmem>>, vector<8x1024xf32>
      tpu.vector_store %arg5[%c0_13, %c0_14], %35 {strides = array<i32>} : memref<8x1024xf32, #tpu.memory_space<vmem>>, vector<8x1024xf32>,
    } else {
    }
    %c0 = arith.constant 0 : index
    %c0_1 = arith.constant 0 : index
    %3 = vector.load %arg2[%c0, %c0_1] : memref<8x1024xf32, #tpu.memory_space<vmem>>, vector<8x1024xf32>
    %c0_2 = arith.constant 0 : index
    %c0_3 = arith.constant 0 : index
    %4 = vector.load %arg3[%c0_2, %c0_3] : memref<8x1024xf32, #tpu.memory_space<vmem>>, vector<8x1024xf32>
    %cst = arith.constant 0.000000e+00 : f32
    %5 = vector.broadcast %cst : f32 to vector<8x1024xf32>
    %6 = arith.maximumf %3, %5 : vector<8x1024xf32>
    %7 = arith.mulf %3, %4 : vector<8x1024xf32>
    %8 = arith.subf %6, %7 : vector<8x1024xf32>
    %9 = math.absf %3 : vector<8x1024xf32>
    %cst_4 = arith.constant 0.000000e+00 : f32
    %10 = vector.broadcast %cst_4 : f32 to vector<8x1024xf32>
    %11 = arith.subf %10, %9 : vector<8x1024xf32>
    %12 = math.exp %11 : vector<8x1024xf32>
    %13 = math.log1p %12 : vector<8x1024xf32>
    %14 = arith.addf %8, %13 : vector<8x1024xf32>
    %c1_i32 = arith.constant 1 : i32
    %15 = arith.muli %arg0, %c1_i32 : i32
    %16 = arith.addi %15, %arg1 : i32
    %17 = tpu.iota {dimensions = array<i32: 0>} : vector<8x1024xi32>
    %18 = tpu.iota {dimensions = array<i32: 1>} : vector<8x1024xi32>
    %c8_i32 = arith.constant 8 : i32
    %19 = arith.muli %16, %c8_i32 : i32
    %20 = vector.broadcast %19 : i32 to vector<8x1024xi32>
    %21 = arith.addi %20, %17 : vector<8x1024xi32>
    %c1024_i32 = arith.constant 1024 : i32
    %22 = vector.broadcast %c1024_i32 : i32 to vector<8x1024xi32>
    %23 = arith.muli %21, %22 : vector<8x1024xi32>
    %24 = arith.addi %23, %18 : vector<8x1024xi32>
    %c2048_i32 = arith.constant 2048 : i32
    %25 = vector.broadcast %c2048_i32 : i32 to vector<8x1024xi32>
    %26 = arith.cmpi slt, %24, %25 : vector<8x1024xi32>
    %cst_5 = arith.constant 0.000000e+00 : f32
    %27 = vector.broadcast %cst_5 : f32 to vector<8x1024xf32>
    %28 = arith.select %26, %14, %27 : vector<8x1024xi1>, vector<8x1024xf32>
    %c0_6 = arith.constant 0 : index
    %c0_7 = arith.constant 0 : index
    %29 = vector.load %arg5[%c0_6, %c0_7] : memref<8x1024xf32, #tpu.memory_space<vmem>>, vector<8x1024xf32>
    %30 = arith.addf %29, %28 : vector<8x1024xf32>
    %c0_8 = arith.constant 0 : index
    %c0_9 = arith.constant 0 : index
    %31 = vector.load %arg5[%c0_8, %c0_9] : memref<8x1024xf32, #tpu.memory_space<vmem>>, vector<8x1024xf32>
    tpu.vector_store %arg5[%c0_8, %c0_9], %30 {strides = array<i32>} : memref<8x1024xf32, #tpu.memory_space<vmem>>, vector<8x1024xf32>,
    %c0_i32_10 = arith.constant 0 : i32
    %32 = arith.cmpi eq, %arg1, %c0_i32_10 : i32
    %33 = arith.extui %32 : i1 to i32
    %c0_i32_11 = arith.constant 0 : i32
    %34 = arith.cmpi ne, %33, %c0_i32_11 : i32
    scf.if %34 {
      %c0_12 = arith.constant 0 : index
      %c0_13 = arith.constant 0 : index
      %35 = vector.load %arg5[%c0_12, %c0_13] : memref<8x1024xf32, #tpu.memory_space<vmem>>, vector<8x1024xf32>
      %36 = vector.shape_cast %35 : vector<8x1024xf32> to vector<1x8x1024xf32>
      %cst_14 = arith.constant dense<0.000000e+00> : vector<1xf32>
      %37 = vector.multi_reduction <add>, %36, %cst_14 [1, 2] : vector<1x8x1024xf32> to vector<1xf32>
      %38 = vector.shape_cast %37 : vector<1xf32> to vector<1x1x1xf32>
      %39 = vector.extract %38[0, 0, 0] : f32 from vector<1x1x1xf32>
      %cst_15 = arith.constant 4.8828125E-4 : f32
      %40 = arith.mulf %39, %cst_15 : f32
      %41 = vector.broadcast %40 : f32 to vector<8x128xf32>
      %c0_16 = arith.constant 0 : index
      %c0_17 = arith.constant 0 : index
      %42 = vector.load %arg4[%c0_16, %c0_17] : memref<8x128xf32, #tpu.memory_space<vmem>>, vector<8x128xf32>
      tpu.vector_store %arg4[%c0_16, %c0_17], %41 {strides = array<i32>} : memref<8x128xf32, #tpu.memory_space<vmem>>, vector<8x128xf32>,
    } else {
    }
    return
  }
  func.func @transform_0(%arg0: i32, %arg1: i32) -> (i32, i32) {
    %c1_i32 = arith.constant 1 : i32
    %0 = arith.muli %arg0, %c1_i32 : i32
    %1 = arith.addi %0, %arg1 : i32
    %c0_i32 = arith.constant 0 : i32
    %c0_i32_0 = arith.constant 0 : i32
    return %1, %c0_i32 : i32, i32
  }
  func.func @transform_1(%arg0: i32, %arg1: i32) -> (i32, i32) {
    %c1_i32 = arith.constant 1 : i32
    %0 = arith.muli %arg0, %c1_i32 : i32
    %1 = arith.addi %0, %arg1 : i32
    %c0_i32 = arith.constant 0 : i32
    %c0_i32_0 = arith.constant 0 : i32
    return %1, %c0_i32 : i32, i32
  }
  func.func @transform_2(%arg0: i32, %arg1: i32) -> (i32, i32) {
    %c0_i32 = arith.constant 0 : i32
    %c0_i32_0 = arith.constant 0 : i32
    return %arg0, %c0_i32 : i32, i32
  }
}

</mosaic_0001>

<llo_original>
// kernel: tpu_custom_call.1
$region0: #{tpu_custom_call.1}
  #allocation0 [shape = 'u32[]', space=smem, size = 0x4, offset = 0x4, fixed_abs, tag = 'smem constant byte address 0x4 - core index']
  #allocation1 [shape = 'u32[144,128]{1,0:T(1,128)}', space=vmem, size = 0x12000, scoped, tag = 'internal scratch']
  #allocation2 [shape = 'f32[8,1024]{1,0:T(8,128)}', space=vmem, size = 0x8000, scoped, tag = 'scratch operand']
  %s0 = inlined_call_operand.hbm [shape: f32[16,1024], index: 0, kind: input, shape index: {}]
  %s1 = inlined_call_operand.hbm [shape: f32[16,1024], index: 1, kind: input, shape index: {}]
  %s2 = inlined_call_operand.hbm [shape: f32[16,128], index: 2, kind: output, shape index: {}]
  %s3 = sld [smem:[#allocation0]]
  $region57: #{tpu_custom_call.1} parent=0
    _
  %s5 = ssub.s32 1, %s3
  %s6 = scalar_select 0, %s5, %s3
  $region1: #{tpu_custom_call.1} parent=0
    #allocation3 [shape = 'u8[65536]{0}', space=vmem, size = 0x10000, scoped, tag = 'input window, operand 0']
    #allocation4 [shape = 's32[2]{0}', space=sflag, size = 0x8, scoped, tag = 'scoped memory for tpu_custom_call.1']
    #allocation5 [shape = 's32[2]{0}', space=sflag, size = 0x8, scoped, tag = 'scoped memory for tpu_custom_call.1']
    #allocation6 [shape = 'u8[65536]{0}', space=vmem, size = 0x10000, scoped, tag = 'input window, operand 1']
    #allocation7 [shape = 's32[2]{0}', space=sflag, size = 0x8, scoped, tag = 'scoped memory for tpu_custom_call.1']
    #allocation8 [shape = 'u8[8192]{0}', space=vmem, size = 0x2000, scoped, tag = 'output window, operand 0']
    %7 = vsyncpa [#allocation4], 0
    %s8 = scalar_lea.sflag [#allocation4], 1
    %9 = vsyncpa %s8, 0
    %10 = vsyncpa [#allocation7], 0
    %s11 = scalar_lea.sflag [#allocation7], 1
    %12 = vsyncpa %s11, 0
    %13 = vsyncpa [#allocation5], 0
    %s14 = scalar_lea.sflag [#allocation5], 1
    %15 = vsyncpa %s14, 0
    loop: start=0, step=1, limit=4
    $region2: #{tpu_custom_call.1} parent=1 // loop_pre_header
      _
    $region3: #{tpu_custom_call.1} parent=1 // loop_header
      %s17 = sphi 0, %s21
      %p18 = scmp.ge.s32.totalorder %s17, 4
      %s24 = sphi 0, %s36
      %s25 = sphi 0, %s32
      %s26 = sphi 0, %s24
      %s27 = sphi 0, %s25
      %s28 = sphi 0, %s26
      %s29 = sphi 0, %s27
      %s41 = sphi 0, %s43
      %s44 = sphi 0, %s41
      %s45 = sphi 0, %s44
      %s61 = sphi 0, %s45
      %s69 = sphi 0, %s71
      %s72 = sphi 0, %s69
      %s73 = sphi 0, %s72
      %s89 = sphi 0, %s73
      %s95 = sphi 0, %s97
      %s98 = sphi 0, %s95
      %s99 = sphi 0, %s98
      %s115 = sphi 0, %s99
    $region4: #{tpu_custom_call.1} parent=1 // loop_header_branch
      %20 = sbr.rel (%p18) target = $region8
    $region5: #{tpu_custom_call.1} parent=1 // loop_body
      %s22 = ssub.s32 %s17, 1
      %s23 = ssub.s32 %s17, 2
      %s30 = sadd.s32 1, %s25
      %p31 = scmp.ge.s32.totalorder %s30, 1
      %s32 = scalar_select %p31, 0, %s30
      %s33 = sadd.s32 1, %s24
      %s34 = scalar_select %p31, %s33, %s24
      %p35 = scmp.ge.s32.totalorder %s34, 2
      %s36 = scalar_select %p35, 0, %s34
      %s37 = sadd.s32 %s24, %s25
      %s38 = sadd.s32 %s36, %s32
      %s39 = ssub.s32 %s37, %s38
      %p40 = scmp.eq.s32.totalorder %s39, 0
      %s42 = sadd.s32 %s41, 1
      %s43 = scalar_select %p40, %s41, %s42
      %p46 = pneg %p40
      %p47 = scmp.eq.s32.totalorder %s17, 1
      %p48 = por %p46, %p47
      %p49 = scmp.ne.s32.totalorder %s41, %s44
      %p50 = scmp.eq.s32.totalorder %s17, 0
      %p51 = por %p49, %p50
      %p52 = scmp.ne.s32.totalorder %s41, %s44
      %p53 = scmp.eq.s32.totalorder %s22, 1
      %p54 = por %p52, %p53
      %p55 = scmp.ne.s32.totalorder %s44, %s45
      %p56 = scmp.eq.s32.totalorder %s22, 0
      %p57 = por %p55, %p56
      %p58 = scmp.ne.s32.totalorder %s44, %s45
      %p59 = scmp.eq.s32.totalorder %s23, 1
      %p60 = por %p58, %p59
      %p62 = scmp.ne.s32.totalorder %s45, %s61
      %p63 = scmp.eq.s32.totalorder %s23, 0
      %p64 = por %p62, %p63
      %s65 = sadd.s32 %s24, %s25
      %s66 = sadd.s32 %s36, %s32
      %s67 = ssub.s32 %s65, %s66
      %p68 = scmp.eq.s32.totalorder %s67, 0
      %s70 = sadd.s32 %s69, 1
      %s71 = scalar_select %p68, %s69, %s70
      %p74 = pneg %p68
      %p75 = scmp.eq.s32.totalorder %s17, 1
      %p76 = por %p74, %p75
      %p77 = scmp.ne.s32.totalorder %s69, %s72
      %p78 = scmp.eq.s32.totalorder %s17, 0
      %p79 = por %p77, %p78
      %p80 = scmp.ne.s32.totalorder %s69, %s72
      %p81 = scmp.eq.s32.totalorder %s22, 1
      %p82 = por %p80, %p81
      %p83 = scmp.ne.s32.totalorder %s72, %s73
      %p84 = scmp.eq.s32.totalorder %s22, 0
      %p85 = por %p83, %p84
      %p86 = scmp.ne.s32.totalorder %s72, %s73
      %p87 = scmp.eq.s32.totalorder %s23, 1
      %p88 = por %p86, %p87
      %p90 = scmp.ne.s32.totalorder %s73, %s89
      %p91 = scmp.eq.s32.totalorder %s23, 0
      %p92 = por %p90, %p91
      %s93 = ssub.s32 %s24, %s36
      %p94 = scmp.eq.s32.totalorder %s93, 0
      %s96 = sadd.s32 %s95, 1
      %s97 = scalar_select %p94, %s95, %s96
      %p100 = pneg %p94
      %p101 = scmp.eq.s32.totalorder %s17, 1
      %p102 = por %p100, %p101
      %p103 = scmp.ne.s32.totalorder %s95, %s98
      %p104 = scmp.eq.s32.totalorder %s17, 0
      %p105 = por %p103, %p104
      %p106 = scmp.ne.s32.totalorder %s95, %s98
      %p107 = scmp.eq.s32.totalorder %s22, 1
      %p108 = por %p106, %p107
      %p109 = scmp.ne.s32.totalorder %s98, %s99
      %p110 = scmp.eq.s32.totalorder %s22, 0
      %p111 = por %p109, %p110
      %p112 = scmp.ne.s32.totalorder %s98, %s99
      %p113 = scmp.eq.s32.totalorder %s23, 1
      %p114 = por %p112, %p113
      %p116 = scmp.ne.s32.totalorder %s99, %s115
      %p117 = scmp.eq.s32.totalorder %s23, 0
      %p118 = por %p116, %p117
      %p119 = scmp.le.s32.totalorder 1, %s17
      %p120 = scmp.lt.s32.totalorder %s17, 3
      %p121 = pnand %p119, %p120
      %p122 = pneg %p121
      // Predicated region
      $region9: #{tpu_custom_call.1} parent=5 // pred_check
        _
      $region10: #{tpu_custom_call.1} parent=5 // pred_check_branch
        %124 = sbr.rel (%p121) target = $region12
      $region11: #{tpu_custom_call.1} parent=5 // pred_region
        %s125 = ssub.s32 %s17, 1
      $region12: #{tpu_custom_call.1} parent=5 // pred_fallthru
        _
      %p126 = scmp.lt.s32.totalorder %s17, 2
      // Predicated region
      $region13: #{tpu_custom_call.1} parent=5 // pred_check
        %p127 = pneg %p126
      $region14: #{tpu_custom_call.1} parent=5 // pred_check_branch
        %129 = sbr.rel (%p127) target = $region16
      $region15: #{tpu_custom_call.1} parent=5 // pred_region
        // Predicated region
        $region17: #{tpu_custom_call.1} parent=15 // pred_check
          %p130 = pneg %p51
        $region18: #{tpu_custom_call.1} parent=15 // pred_check_branch
          %132 = sbr.rel (%p130) target = $region20
        $region19: #{tpu_custom_call.1} parent=15 // pred_region
          %s133 = sand.u32 %s41, 1
          %s134 = scalar_lea.sflag [#allocation4], %s133
          %s135 = sand.u32 %s41, 1
          %s136 = smul.addr %s135, 64
          %s137 = scalar_lea.vmem [#allocation3], %s136
          %s138 = sadd.s32 %s24, %s25
          %s140 = ssub.s32 1024, 1024
          %141 = vsyncadd %s134, %s140
          %s142 = smul.addr %s138, 8
          %s143 = smul.addr %s142, 128
          %s144 = scalar_lea.hbm %s0, %s143
          %s146 = sshll.u32 %s137, 4
          %s147 = int_to_ptr.vmem [resolvable:$true] %s146
          %149 = dma.hbm_to_vmem [thread:$0]  %s144, 1024, %s147, %s134
        $region20: #{tpu_custom_call.1} parent=15 // pred_fallthru
          _
        // Predicated region
        $region21: #{tpu_custom_call.1} parent=15 // pred_check
          %p150 = pneg %p79
        $region22: #{tpu_custom_call.1} parent=15 // pred_check_branch
          %152 = sbr.rel (%p150) target = $region24
        $region23: #{tpu_custom_call.1} parent=15 // pred_region
          %s153 = sand.u32 %s69, 1
          %s154 = scalar_lea.sflag [#allocation7], %s153
          %s155 = sand.u32 %s69, 1
          %s156 = smul.addr %s155, 64
          %s157 = scalar_lea.vmem [#allocation6], %s156
          %s158 = sadd.s32 %s24, %s25
          %s160 = ssub.s32 1024, 1024
          %161 = vsyncadd %s154, %s160
          %s162 = smul.addr %s158, 8
          %s163 = smul.addr %s162, 128
          %s164 = scalar_lea.hbm %s1, %s163
          %s166 = sshll.u32 %s157, 4
          %s167 = int_to_ptr.vmem [resolvable:$true] %s166
          %169 = dma.hbm_to_vmem [thread:$0]  %s164, 1024, %s167, %s154
        $region24: #{tpu_custom_call.1} parent=15 // pred_fallthru
          _
      $region16: #{tpu_custom_call.1} parent=5 // pred_fallthru
        _
      %p170 = scmp.le.s32.totalorder 1, %s17
      %p171 = scmp.lt.s32.totalorder %s17, 3
      %p172 = pnand %p170, %p171
      %p173 = pneg %p172
      // Predicated region
      $region25: #{tpu_custom_call.1} parent=5 // pred_check
        _
      $region26: #{tpu_custom_call.1} parent=5 // pred_check_branch
        %175 = sbr.rel (%p172) target = $region28
      $region27: #{tpu_custom_call.1} parent=5 // pred_region
        %s176 = ssub.s32 %s17, 1
        %s177 = sand.u32 %s44, 1
        %s178 = scalar_lea.sflag [#allocation4], %s177
        %s179 = sand.u32 %s44, 1
        %s180 = smul.addr %s179, 64
        %s181 = scalar_lea.vmem [#allocation3], %s180
        // Predicated region
        $region29: #{tpu_custom_call.1} parent=27 // pred_check
          %p182 = pneg %p57
        $region30: #{tpu_custom_call.1} parent=27 // pred_check_branch
          %184 = sbr.rel (%p182) target = $region32
        $region31: #{tpu_custom_call.1} parent=27 // pred_region
          %185 = dma.done %s178, 1024
        $region32: #{tpu_custom_call.1} parent=27 // pred_fallthru
          _
        %s186 = sand.u32 %s72, 1
        %s187 = scalar_lea.sflag [#allocation7], %s186
        %s188 = sand.u32 %s72, 1
        %s189 = smul.addr %s188, 64
        %s190 = scalar_lea.vmem [#allocation6], %s189
        // Predicated region
        $region33: #{tpu_custom_call.1} parent=27 // pred_check
          %p191 = pneg %p85
        $region34: #{tpu_custom_call.1} parent=27 // pred_check_branch
          %193 = sbr.rel (%p191) target = $region36
        $region35: #{tpu_custom_call.1} parent=27 // pred_region
          %194 = dma.done %s187, 1024
        $region36: #{tpu_custom_call.1} parent=27 // pred_fallthru
          _
        %s195 = sand.u32 %s44, 1
        %s196 = scalar_lea.sflag [#allocation4], %s195
        %s197 = sand.u32 %s44, 1
        %s198 = smul.addr %s197, 64
        %s199 = scalar_lea.vmem [#allocation3], %s198
        %p200 = pneg %p57
        %p201 = pneg %p54
        %s202 = sand.u32 %s72, 1
        %s203 = scalar_lea.sflag [#allocation7], %s202
        %s204 = sand.u32 %s72, 1
        %s205 = smul.addr %s204, 64
        %s206 = scalar_lea.vmem [#allocation6], %s205
        %p207 = pneg %p85
        %p208 = pneg %p82
        %p209 = pneg %p111
        %p210 = pneg %p108
        %s211 = sand.u32 %s98, 1
        %s212 = scalar_lea.sflag [#allocation5], %s211
        %s213 = sand.u32 %s98, 1
        %s214 = smul.addr %s213, 8
        %s215 = scalar_lea.vmem [#allocation8], %s214
        %s216 = sadd.s32 %s26, %s27
        %s217 = sadd.s32 %s26, %s27
        %p218 = scmp.eq.s32.totalorder %s27, 0
        // Predicated region
        $region37: #{tpu_custom_call.1} parent=27 // pred_check
          %p219 = pneg %p218
        $region38: #{tpu_custom_call.1} parent=27 // pred_check_branch
          %221 = sbr.rel (%p219) target = $region40
        $region39: #{tpu_custom_call.1} parent=27 // pred_region
          %222 = vst [vmem:[#allocation2] sm:$0xff] 0.0
          %223 = vst [vmem:[#allocation2 + $0x8] sm:$0xff] 0.0
          %224 = vst [vmem:[#allocation2 + $0x10] sm:$0xff] 0.0
          %225 = vst [vmem:[#allocation2 + $0x18] sm:$0xff] 0.0
          %226 = vst [vmem:[#allocation2 + $0x20] sm:$0xff] 0.0
          %227 = vst [vmem:[#allocation2 + $0x28] sm:$0xff] 0.0
          %228 = vst [vmem:[#allocation2 + $0x30] sm:$0xff] 0.0
          %229 = vst [vmem:[#allocation2 + $0x38] sm:$0xff] 0.0
        $region40: #{tpu_custom_call.1} parent=27 // pred_fallthru
          _
        %v230 = vld [vmem:[%s181] sm:$0xff]
        %v231 = vld [vmem:[%s181 + $0x8] sm:$0xff]
        %v232 = vld [vmem:[%s181 + $0x10] sm:$0xff]
        %v233 = vld [vmem:[%s181 + $0x18] sm:$0xff]
        %v234 = vld [vmem:[%s181 + $0x20] sm:$0xff]
        %v235 = vld [vmem:[%s181 + $0x28] sm:$0xff]
        %v236 = vld [vmem:[%s181 + $0x30] sm:$0xff]
        %v237 = vld [vmem:[%s181 + $0x38] sm:$0xff]
        %v238 = vld [vmem:[%s190] sm:$0xff]
        %v239 = vld [vmem:[%s190 + $0x8] sm:$0xff]
        %v240 = vld [vmem:[%s190 + $0x10] sm:$0xff]
        %v241 = vld [vmem:[%s190 + $0x18] sm:$0xff]
        %v242 = vld [vmem:[%s190 + $0x20] sm:$0xff]
        %v243 = vld [vmem:[%s190 + $0x28] sm:$0xff]
        %v244 = vld [vmem:[%s190 + $0x30] sm:$0xff]
        %v245 = vld [vmem:[%s190 + $0x38] sm:$0xff]
        %v246 = vmax.f32 %v230, 0.0
        %v247 = vmax.f32 %v231, 0.0
        %v248 = vmax.f32 %v232, 0.0
        %v249 = vmax.f32 %v233, 0.0
        %v250 = vmax.f32 %v234, 0.0
        %v251 = vmax.f32 %v235, 0.0
        %v252 = vmax.f32 %v236, 0.0
        %v253 = vmax.f32 %v237, 0.0
        %v254 = vmul.f32 %v230, %v238
        %v255 = vmul.f32 %v231, %v239
        %v256 = vmul.f32 %v232, %v240
        %v257 = vmul.f32 %v233, %v241
        %v258 = vmul.f32 %v234, %v242
        %v259 = vmul.f32 %v235, %v243
        %v260 = vmul.f32 %v236, %v244
        %v261 = vmul.f32 %v237, %v245
        %v262 = vsub.f32 %v246, %v254
        %v263 = vsub.f32 %v247, %v255
        %v264 = vsub.f32 %v248, %v256
        %v265 = vsub.f32 %v249, %v257
        %v266 = vsub.f32 %v250, %v258
        %v267 = vsub.f32 %v251, %v259
        %v268 = vsub.f32 %v252, %v260
        %v269 = vsub.f32 %v253, %v261
        %v270 = vand.u32 2147483647, %v230
        %v271 = vand.u32 2147483647, %v231
        %v272 = vand.u32 2147483647, %v232
        %v273 = vand.u32 2147483647, %v233
        %v274 = vand.u32 2147483647, %v234
        %v275 = vand.u32 2147483647, %v235
        %v276 = vand.u32 2147483647, %v236
        %v277 = vand.u32 2147483647, %v237
        %v278 = vsub.f32 0.0, %v270
        %v279 = vsub.f32 0.0, %v271
        %v280 = vsub.f32 0.0, %v272
        %v281 = vsub.f32 0.0, %v273
        %v282 = vsub.f32 0.0, %v274
        %v283 = vsub.f32 0.0, %v275
        %v284 = vsub.f32 0.0, %v276
        %v285 = vsub.f32 0.0, %v277
        %v286 = vmul.f32 %v278, 1.442695
        %v287 = vpow.pop %v286
        %v288 = vmul.f32 %v279, 1.442695
        %v289 = vpow.pop %v288
        %v290 = vmul.f32 %v280, 1.442695
        %v291 = vpow.pop %v290
        %v292 = vmul.f32 %v281, 1.442695
        %v293 = vpow.pop %v292
        %v294 = vmul.f32 %v282, 1.442695
        %v295 = vpow.pop %v294
        %v296 = vmul.f32 %v283, 1.442695
        %v297 = vpow.pop %v296
        %v298 = vmul.f32 %v284, 1.442695
        %v299 = vpow.pop %v298
        %v300 = vmul.f32 %v285, 1.442695
        %v301 = vpow.pop %v300
        %v302 = vadd.f32 %v287, 1.0
        %v303 = vlog2.pop %v302
        %v304 = vmul.f32 %v303, 0.6931472
        %v305 = vmul.f32 -0.5, %v287
        %v306 = vadd.f32 %v305, 1.0
        %v307 = vmul.f32 %v306, %v287
        %v308 = vand.u32 2147483647, %v287
        %vm309 = vcmp.lt.f32.partialorder %v308, 0.0004427343
        %v310 = vsel %vm309, %v307, %v304
        %v311 = vadd.f32 %v289, 1.0
        %v312 = vlog2.pop %v311
        %v313 = vmul.f32 %v312, 0.6931472
        %v314 = vmul.f32 -0.5, %v289
        %v315 = vadd.f32 %v314, 1.0
        %v316 = vmul.f32 %v315, %v289
        %v317 = vand.u32 2147483647, %v289
        %vm318 = vcmp.lt.f32.partialorder %v317, 0.0004427343
        %v319 = vsel %vm318, %v316, %v313
        %v320 = vadd.f32 %v291, 1.0
        %v321 = vlog2.pop %v320
        %v322 = vmul.f32 %v321, 0.6931472
        %v323 = vmul.f32 -0.5, %v291
        %v324 = vadd.f32 %v323, 1.0
        %v325 = vmul.f32 %v324, %v291
        %v326 = vand.u32 2147483647, %v291
        %vm327 = vcmp.lt.f32.partialorder %v326, 0.0004427343
        %v328 = vsel %vm327, %v325, %v322
        %v329 = vadd.f32 %v293, 1.0
        %v330 = vlog2.pop %v329
        %v331 = vmul.f32 %v330, 0.6931472
        %v332 = vmul.f32 -0.5, %v293
        %v333 = vadd.f32 %v332, 1.0
        %v334 = vmul.f32 %v333, %v293
        %v335 = vand.u32 2147483647, %v293
        %vm336 = vcmp.lt.f32.partialorder %v335, 0.0004427343
        %v337 = vsel %vm336, %v334, %v331
        %v338 = vadd.f32 %v295, 1.0
        %v339 = vlog2.pop %v338
        %v340 = vmul.f32 %v339, 0.6931472
        %v341 = vmul.f32 -0.5, %v295
        %v342 = vadd.f32 %v341, 1.0
        %v343 = vmul.f32 %v342, %v295
        %v344 = vand.u32 2147483647, %v295
        %vm345 = vcmp.lt.f32.partialorder %v344, 0.0004427343
        %v346 = vsel %vm345, %v343, %v340
        %v347 = vadd.f32 %v297, 1.0
        %v348 = vlog2.pop %v347
        %v349 = vmul.f32 %v348, 0.6931472
        %v350 = vmul.f32 -0.5, %v297
        %v351 = vadd.f32 %v350, 1.0
        %v352 = vmul.f32 %v351, %v297
        %v353 = vand.u32 2147483647, %v297
        %vm354 = vcmp.lt.f32.partialorder %v353, 0.0004427343
        %v355 = vsel %vm354, %v352, %v349
        %v356 = vadd.f32 %v299, 1.0
        %v357 = vlog2.pop %v356
        %v358 = vmul.f32 %v357, 0.6931472
        %v359 = vmul.f32 -0.5, %v299
        %v360 = vadd.f32 %v359, 1.0
        %v361 = vmul.f32 %v360, %v299
        %v362 = vand.u32 2147483647, %v299
        %vm363 = vcmp.lt.f32.partialorder %v362, 0.0004427343
        %v364 = vsel %vm363, %v361, %v358
        %v365 = vadd.f32 %v301, 1.0
        %v366 = vlog2.pop %v365
        %v367 = vmul.f32 %v366, 0.6931472
        %v368 = vmul.f32 -0.5, %v301
        %v369 = vadd.f32 %v368, 1.0
        %v370 = vmul.f32 %v369, %v301
        %v371 = vand.u32 2147483647, %v301
        %vm372 = vcmp.lt.f32.partialorder %v371, 0.0004427343
        %v373 = vsel %vm372, %v370, %v367
        %v374 = vadd.f32 %v262, %v310
        %v375 = vadd.f32 %v263, %v319
        %v376 = vadd.f32 %v264, %v328
        %v377 = vadd.f32 %v265, %v337
        %v378 = vadd.f32 %v266, %v346
        %v379 = vadd.f32 %v267, %v355
        %v380 = vadd.f32 %v268, %v364
        %v381 = vadd.f32 %v269, %v373
        %s382 = sadd.s32 %s26, %s27
        %v383 = vlaneseq
        %v384 = vshrl.u32 %v383, 7
        %v385 = vlaneseq
        %v386 = vand.u32 %v385, 127
        %v387 = vadd.s32 %v386, 128
        %v388 = vadd.s32 %v386, 256
        %v389 = vadd.s32 %v386, 384
        %v390 = vadd.s32 %v386, 512
        %v391 = vadd.s32 %v386, 640
        %v392 = vadd.s32 %v386, 768
        %v393 = vadd.s32 %v386, 896
        %s394 = smul.u32 %s382, 8
        %v395 = vstv %s394
        %v396 = vadd.s32 %v395, %v384
        %v397 = vmul.u32 %v396, 1024
        %v398 = vadd.s32 %v397, %v386
        %v399 = vadd.s32 %v397, %v387
        %v400 = vadd.s32 %v397, %v388
        %v401 = vadd.s32 %v397, %v389
        %v402 = vadd.s32 %v397, %v390
        %v403 = vadd.s32 %v397, %v391
        %v404 = vadd.s32 %v397, %v392
        %v405 = vadd.s32 %v397, %v393
        %vm406 = vcmp.lt.s32.totalorder %v398, 2048
        %vm407 = vcmp.lt.s32.totalorder %v399, 2048
        %vm408 = vcmp.lt.s32.totalorder %v400, 2048
        %vm409 = vcmp.lt.s32.totalorder %v401, 2048
        %vm410 = vcmp.lt.s32.totalorder %v402, 2048
        %vm411 = vcmp.lt.s32.totalorder %v403, 2048
        %vm412 = vcmp.lt.s32.totalorder %v404, 2048
        %vm413 = vcmp.lt.s32.totalorder %v405, 2048
        %v414 = vsel %vm406, %v374, 0.0
        %v415 = vsel %vm407, %v375, 0.0
        %v416 = vsel %vm408, %v376, 0.0
        %v417 = vsel %vm409, %v377, 0.0
        %v418 = vsel %vm410, %v378, 0.0
        %v419 = vsel %vm411, %v379, 0.0
        %v420 = vsel %vm412, %v380, 0.0
        %v421 = vsel %vm413, %v381, 0.0
        %v422 = vld [vmem:[#allocation2] sm:$0xff]
        %v423 = vld [vmem:[#allocation2 + $0x8] sm:$0xff]
        %v424 = vld [vmem:[#allocation2 + $0x10] sm:$0xff]
        %v425 = vld [vmem:[#allocation2 + $0x18] sm:$0xff]
        %v426 = vld [vmem:[#allocation2 + $0x20] sm:$0xff]
        %v427 = vld [vmem:[#allocation2 + $0x28] sm:$0xff]
        %v428 = vld [vmem:[#allocation2 + $0x30] sm:$0xff]
        %v429 = vld [vmem:[#allocation2 + $0x38] sm:$0xff]
        %v430 = vadd.f32 %v422, %v414
        %v431 = vadd.f32 %v423, %v415
        %v432 = vadd.f32 %v424, %v416
        %v433 = vadd.f32 %v425, %v417
        %v434 = vadd.f32 %v426, %v418
        %v435 = vadd.f32 %v427, %v419
        %v436 = vadd.f32 %v428, %v420
        %v437 = vadd.f32 %v429, %v421
        %438 = vst [vmem:[#allocation2] sm:$0xff] %v430
        %439 = vst [vmem:[#allocation2 + $0x8] sm:$0xff] %v431
        %440 = vst [vmem:[#allocation2 + $0x10] sm:$0xff] %v432
        %441 = vst [vmem:[#allocation2 + $0x18] sm:$0xff] %v433
        %442 = vst [vmem:[#allocation2 + $0x20] sm:$0xff] %v434
        %443 = vst [vmem:[#allocation2 + $0x28] sm:$0xff] %v435
        %444 = vst [vmem:[#allocation2 + $0x30] sm:$0xff] %v436
        %445 = vst [vmem:[#allocation2 + $0x38] sm:$0xff] %v437
        // Predicated region
        $region41: #{tpu_custom_call.1} parent=27 // pred_check
          %p446 = pneg %p218
        $region42: #{tpu_custom_call.1} parent=27 // pred_check_branch
          %448 = sbr.rel (%p446) target = $region44
        $region43: #{tpu_custom_call.1} parent=27 // pred_region
          %v449 = vld [vmem:[#allocation2] sm:$0xff]
          %v450 = vld [vmem:[#allocation2 + $0x8] sm:$0xff]
          %v451 = vld [vmem:[#allocation2 + $0x10] sm:$0xff]
          %v452 = vld [vmem:[#allocation2 + $0x18] sm:$0xff]
          %v453 = vld [vmem:[#allocation2 + $0x20] sm:$0xff]
          %v454 = vld [vmem:[#allocation2 + $0x28] sm:$0xff]
          %v455 = vld [vmem:[#allocation2 + $0x30] sm:$0xff]
          %v456 = vld [vmem:[#allocation2 + $0x38] sm:$0xff]
          %v457 = vadd.f32 %v449, %v450
          %v458 = vadd.f32 %v457, %v451
          %v459 = vadd.f32 %v458, %v452
          %v460 = vadd.f32 %v459, %v453
          %v461 = vadd.f32 %v460, %v454
          %v462 = vadd.f32 %v461, %v455
          %v463 = vadd.f32 %v462, %v456
          %464 = vadd.xlane.f32.xlu0 %v463
          %v465 = vpop.xlane.xlu0 %464
          %v466 = vrot.slane %v465, 4
          %v467 = vadd.f32 %v465, %v466
          %v468 = vrot.slane %v467, 2
          %v469 = vadd.f32 %v467, %v468
          %v470 = vrot.slane %v469, 1
          %v471 = vadd.f32 %v469, %v470
          %s472 = vtos %v471
          %s473 = smul.f32 %s472, 0.00048828125
          %v474 = vstv %s473
          %475 = vst [vmem:[%s215] sm:$0xff] %v474
        $region44: #{tpu_custom_call.1} parent=27 // pred_fallthru
          _
        %s476 = sand.u32 %s98, 1
        %s477 = scalar_lea.sflag [#allocation5], %s476
        %s478 = sand.u32 %s98, 1
        %s479 = smul.addr %s478, 8
        %s480 = scalar_lea.vmem [#allocation8], %s479
        // Predicated region
        $region45: #{tpu_custom_call.1} parent=27 // pred_check
          %p481 = pneg %p108
        $region46: #{tpu_custom_call.1} parent=27 // pred_check_branch
          %483 = sbr.rel (%p481) target = $region48
        $region47: #{tpu_custom_call.1} parent=27 // pred_region
          %s485 = ssub.s32 128, 128
          %486 = vsyncadd %s477, %s485
          %s487 = smul.addr %s26, 128
          %s488 = scalar_lea.hbm %s2, %s487
          %s490 = sshll.u32 %s480, 4
          %s491 = int_to_ptr.vmem [resolvable:$true] %s490
          %493 = dma.vmem_to_hbm [thread:$0]  %s491, 128, %s488, %s477
        $region48: #{tpu_custom_call.1} parent=27 // pred_fallthru
          _
      $region28: #{tpu_custom_call.1} parent=5 // pred_fallthru
        _
      %p494 = scmp.le.s32.totalorder 2, %s17
      // Predicated region
      $region49: #{tpu_custom_call.1} parent=5 // pred_check
        %p495 = pneg %p494
      $region50: #{tpu_custom_call.1} parent=5 // pred_check_branch
        %497 = sbr.rel (%p495) target = $region52
      $region51: #{tpu_custom_call.1} parent=5 // pred_region
        %s498 = ssub.s32 %s17, 2
        // Predicated region
        $region53: #{tpu_custom_call.1} parent=51 // pred_check
          %p499 = pneg %p114
        $region54: #{tpu_custom_call.1} parent=51 // pred_check_branch
          %501 = sbr.rel (%p499) target = $region56
        $region55: #{tpu_custom_call.1} parent=51 // pred_region
          %s502 = sand.u32 %s99, 1
          %s503 = scalar_lea.sflag [#allocation5], %s502
          %s504 = sand.u32 %s99, 1
          %s505 = smul.addr %s504, 8
          %s506 = scalar_lea.vmem [#allocation8], %s505
          %507 = dma.done %s503, 128
        $region56: #{tpu_custom_call.1} parent=51 // pred_fallthru
          _
      $region52: #{tpu_custom_call.1} parent=5 // pred_fallthru
        _
    $region6: #{tpu_custom_call.1} parent=1 // loop_footer
      %s21 = sadd.s32 1, %s17
    $region7: #{tpu_custom_call.1} parent=1 // loop_footer_branch
      %16 = sbr.rel target = $region3
    $region8: #{tpu_custom_call.1} parent=1 // loop_exit
      _
    %508 = vsyncpa [#allocation4], 1
    %s509 = scalar_lea.sflag [#allocation4], 1
    %510 = vsyncpa %s509, 1
    %511 = vsyncpa [#allocation7], 1
    %s512 = scalar_lea.sflag [#allocation7], 1
    %513 = vsyncpa %s512, 1
    %514 = vsyncpa [#allocation5], 1
    %s515 = scalar_lea.sflag [#allocation5], 1
    %516 = vsyncpa %s515, 1

</llo_original>
